<compile_context>
chip_gen: v7x
topology: tpu7x:2x2x1
jax: 0.10.0
libtpu: 0.0.40
codegen_flags: <defaults>
</compile_context>

<pallas_src>
import math

import jax
import jax.numpy as jnp
from jax.experimental import pallas as pl
from jax.experimental.pallas import tpu as pltpu

LANE = 128  # TPU lane width; rounding target for the hidden (resident) dims.


def _round_up(n, m):
    return (n + m - 1) // m * m


def _mlp_kernel(x_ref, w1_ref, b1_ref, w2_ref, b2_ref, w3_ref, b3_ref, o_ref):
    # One (tile_b, in_dim) activation tile per grid step; weights/biases use a
    # constant index_map so they stay VMEM-resident across steps (no re-DMA).
    x = x_ref[...]
    h1 = jnp.dot(x, w1_ref[...], preferred_element_type=jnp.float32) + b1_ref[...]
    h1 = jnp.maximum(h1, 0.0)
    h2 = jnp.dot(h1, w2_ref[...], preferred_element_type=jnp.float32) + b2_ref[...]
    h2 = jnp.maximum(h2, 0.0)
    y = jnp.dot(h2, w3_ref[...], preferred_element_type=jnp.float32) + b3_ref[...]
    o_ref[...] = y.astype(o_ref.dtype)  # native-width (n_actions) store


def init_params(key, input_dim, fc1_dim, fc2_dim, n_actions):
    """PyTorch nn.Linear-style init: U(-1/sqrt(fan_in), 1/sqrt(fan_in)).

    Weights are stored transposed relative to PyTorch: [in, out].
    """
    def linear(k, fan_in, fan_out):
        kw, kb = jax.random.split(k)
        bound = 1.0 / math.sqrt(fan_in)
        w = jax.random.uniform(kw, (fan_in, fan_out), jnp.float32, -bound, bound)
        b = jax.random.uniform(kb, (1, fan_out), jnp.float32, -bound, bound)
        return w, b

    k1, k2, k3 = jax.random.split(key, 3)
    w1, b1 = linear(k1, input_dim, fc1_dim)
    w2, b2 = linear(k2, fc1_dim, fc2_dim)
    w3, b3 = linear(k3, fc2_dim, n_actions)
    return {"w1": w1, "b1": b1, "w2": w2, "b2": b2, "w3": w3, "b3": b3}


def _pad2d(a, rows, cols):
    r, c = a.shape
    if (rows, cols) == (r, c):
        return a
    return jnp.zeros((rows, cols), a.dtype).at[:r, :c].set(a)


def pad_params(params):
    """Zero-pad only the hidden (VMEM-resident) dims to lane (128) multiples.

    Input feature dim and n_actions stay native so the streamed x tile and the
    output store carry no padding bytes. Zero padding is inert: padded weight
    columns/rows and bias lanes are 0 and ReLU(0)=0.
    """
    in_dim, h1 = params["w1"].shape
    h2 = params["w2"].shape[1]
    n_actions = params["w3"].shape[1]
    h1p, h2p = _round_up(h1, LANE), _round_up(h2, LANE)
    return {
        "w1": _pad2d(params["w1"], in_dim, h1p),   # (in_dim, 128)
        "b1": _pad2d(params["b1"], 1, h1p),        # (1, 128)
        "w2": _pad2d(params["w2"], h1p, h2p),      # (128, 128)
        "b2": _pad2d(params["b2"], 1, h2p),        # (1, 128)
        "w3": _pad2d(params["w3"], h2p, n_actions),  # (128, n_actions)
        "b3": params["b3"],                        # (1, n_actions)
    }


def _choose_tile_b(batch):
    """Big tiles amortize per-step overhead; keep >=2 steps for v7x megacore."""
    b8 = max(8, _round_up(batch, 8))
    if b8 <= 16:
        return b8
    half = _round_up(-(-b8 // 2), 8)   # ceil(b8/2) rounded to sublane multiple
    return min(2048, half)


def generic_network_forward(x, padded_params, *, tile_b=None):
    """Fused 3-layer MLP forward as one Pallas kernel with a batch grid.

    x: [batch, input_dim] float32 (unpadded, native feature width)
    padded_params: output of pad_params()
    returns: [batch, n_actions] float32
    """
    pp = padded_params
    batch, in_dim = x.shape
    h1p = pp["w1"].shape[1]
    h2p = pp["w2"].shape[1]
    n_actions = pp["w3"].shape[1]

    if tile_b is None:
        tile_b = _choose_tile_b(batch)
    tile_b = max(8, _round_up(int(tile_b), 8))  # f32 sublane constraint

    b_pad = _round_up(batch, tile_b)
    if b_pad != batch:
        # Only pad batch rows when needed (extra rows compute garbage that is
        # sliced off below; weights see only zeros appended -> harmless).
        x_in = jnp.zeros((b_pad, in_dim), x.dtype).at[:batch, :].set(x)
    else:
        x_in = x  # no wrapper copy

    grid = (b_pad // tile_b,)
    const = lambda i: (0, 0)  # resident weights/biases: same block every step

    flops = 2 * batch * (in_dim * h1p + h1p * h2p + h2p * n_actions)
    bytes_accessed = 4 * (
        x_in.size + b_pad * n_actions + sum(int(v.size) for v in pp.values())
    )
    cost = pl.CostEstimate(
        flops=flops, transcendentals=0, bytes_accessed=bytes_accessed
    )

    out = pl.pallas_call(
        _mlp_kernel,
        out_shape=jax.ShapeDtypeStruct((b_pad, n_actions), jnp.float32),
        grid=grid,
        in_specs=[
            pl.BlockSpec((tile_b, in_dim), lambda i: (i, 0)),   # x (streamed, native width)
            pl.BlockSpec((in_dim, h1p), const),                 # w1 (resident)
            pl.BlockSpec((1, h1p), const),                      # b1
            pl.BlockSpec((h1p, h2p), const),                    # w2
            pl.BlockSpec((1, h2p), const),                      # b2
            pl.BlockSpec((h2p, n_actions), const),              # w3
            pl.BlockSpec((1, n_actions), const),                # b3
        ],
        out_specs=pl.BlockSpec((tile_b, n_actions), lambda i: (i, 0)),
        compiler_params=pltpu.CompilerParams(
            dimension_semantics=("parallel",),  # shard batch grid across TCs on v7x
        ),
        cost_estimate=cost,
    )(x_in, pp["w1"], pp["b1"], pp["w2"], pp["b2"], pp["w3"], pp["b3"])

    if b_pad != batch:
        out = out[:batch]
    return out


def reference_forward(x, params):
    h1 = jax.nn.relu(x @ params["w1"] + params["b1"])
    h2 = jax.nn.relu(h1 @ params["w2"] + params["b2"])
    return h2 @ params["w3"] + params["b3"]


if __name__ == "__main__":
    # HP = {'input_dim': (8,), 'fc1': 32, 'fc2': 32, 'n_action': 4}
    input_dim, fc1_dim, fc2_dim, n_actions = 8, 32, 32, 4

    key = jax.random.PRNGKey(0)
    pkey, xkey, xkey2 = jax.random.split(key, 3)
    params = init_params(pkey, input_dim, fc1_dim, fc2_dim, n_actions)
    pparams = pad_params(params)

    # Small case matching the module's typical per-step RL call.
    # (Launch/DMA-latency dominated at this size; kept to exercise the path.)
    batch = 8
    x = jax.random.normal(xkey, (batch, input_dim), dtype=jnp.float32)
    out = generic_network_forward(x, pparams)
    out = jax.block_until_ready(out)
    ref = reference_forward(x, params)
    assert out.shape == (batch, n_actions)
    assert jnp.allclose(out, ref, atol=1e-4, rtol=1e-4)

    # Larger batched slab (many env states / timesteps fused into one call):
    # default tile selection -> tile_b=512, grid=(2,) so both v7x TCs get work.
    big_batch = 1024
    xb = jax.random.normal(xkey2, (big_batch, input_dim), dtype=jnp.float32)
    outb = generic_network_forward(xb, pparams)
    outb = jax.block_until_ready(outb)
    refb = reference_forward(xb, params)
    assert outb.shape == (big_batch, n_actions)
    assert jnp.allclose(outb, refb, atol=1e-4, rtol=1e-4)

    # Non-multiple batch to exercise the (only-when-needed) row-padding path.
    odd_batch = 100
    xo = jax.random.normal(xkey, (odd_batch, input_dim), dtype=jnp.float32)
    outo = jax.block_until_ready(generic_network_forward(xo, pparams))
    refo = reference_forward(xo, params)
    assert outo.shape == (odd_batch, n_actions)
    assert jnp.allclose(outo, refo, atol=1e-4, rtol=1e-4)

    # TODO(synk): optimizer (Adam) / training step of GenericNetwork is host-side
    # state, not part of the forward pass, and is intentionally not implemented.

    print("KERNEL_OK")
</pallas_src>

<mosaic_0001>
module attributes {stable_mosaic.version = 11 : i64} {
  func.func @_mlp_kernel(%arg0: i32, %arg1: memref<8x8xf32, #tpu.memory_space<vmem>>, %arg2: memref<8x128xf32, #tpu.memory_space<vmem>>, %arg3: memref<1x128xf32, #tpu.memory_space<vmem>>, %arg4: memref<128x128xf32, #tpu.memory_space<vmem>>, %arg5: memref<1x128xf32, #tpu.memory_space<vmem>>, %arg6: memref<128x4xf32, #tpu.memory_space<vmem>>, %arg7: memref<1x4xf32, #tpu.memory_space<vmem>>, %arg8: memref<8x4xf32, #tpu.memory_space<vmem>>) attributes {dimension_semantics = [#tpu.dimension_semantics<parallel>], iteration_bounds = array<i64: 1>, scalar_prefetch = 0 : i64, scratch_operands = 0 : i64, tpu.core_type = #tpu.core_type<tc>, window_params = [{transform_indices = @transform_0, window_bounds = array<i64: 8, 8>}, {pipeline_mode = #tpu.pipeline_mode<synchronous>, transform_indices = @transform_1, window_bounds = array<i64: 8, 128>}, {pipeline_mode = #tpu.pipeline_mode<synchronous>, transform_indices = @transform_2, window_bounds = array<i64: 1, 128>}, {pipeline_mode = #tpu.pipeline_mode<synchronous>, transform_indices = @transform_3, window_bounds = array<i64: 128, 128>}, {pipeline_mode = #tpu.pipeline_mode<synchronous>, transform_indices = @transform_4, window_bounds = array<i64: 1, 128>}, {pipeline_mode = #tpu.pipeline_mode<synchronous>, transform_indices = @transform_5, window_bounds = array<i64: 128, 4>}, {pipeline_mode = #tpu.pipeline_mode<synchronous>, transform_indices = @transform_6, window_bounds = array<i64: 1, 4>}, {transform_indices = @transform_7, window_bounds = array<i64: 8, 4>}]} {
    %c0 = arith.constant 0 : index
    %c0_0 = arith.constant 0 : index
    %0 = vector.load %arg1[%c0, %c0_0] : memref<8x8xf32, #tpu.memory_space<vmem>>, vector<8x8xf32>
    %c0_1 = arith.constant 0 : index
    %c0_2 = arith.constant 0 : index
    %1 = vector.load %arg2[%c0_1, %c0_2] : memref<8x128xf32, #tpu.memory_space<vmem>>, vector<8x128xf32>
    %cst = arith.constant dense<0.000000e+00> : vector<8x128xf32>
    %2 = tpu.matmul %0, %1, %cst {dimension_numbers = #tpu.dot_dimension_numbers<[1], [0], [0], [1], [0, 0, 1, 1], [], []>} : vector<8x8xf32>, vector<8x128xf32>, vector<8x128xf32> -> vector<8x128xf32>
    %c0_3 = arith.constant 0 : index
    %c0_4 = arith.constant 0 : index
    %3 = vector.load %arg3[%c0_3, %c0_4] : memref<1x128xf32, #tpu.memory_space<vmem>>, vector<1x128xf32>
    %4 = vector.broadcast %3 : vector<1x128xf32> to vector<8x128xf32>
    %5 = arith.addf %2, %4 : vector<8x128xf32>
    %cst_5 = arith.constant 0.000000e+00 : f32
    %6 = vector.broadcast %cst_5 : f32 to vector<8x128xf32>
    %7 = arith.maximumf %5, %6 : vector<8x128xf32>
    %c0_6 = arith.constant 0 : index
    %c0_7 = arith.constant 0 : index
    %8 = vector.load %arg4[%c0_6, %c0_7] : memref<128x128xf32, #tpu.memory_space<vmem>>, vector<128x128xf32>
    %cst_8 = arith.constant dense<0.000000e+00> : vector<8x128xf32>
    %9 = tpu.matmul %7, %8, %cst_8 {dimension_numbers = #tpu.dot_dimension_numbers<[1], [0], [0], [1], [0, 0, 1, 1], [], []>} : vector<8x128xf32>, vector<128x128xf32>, vector<8x128xf32> -> vector<8x128xf32>
    %c0_9 = arith.constant 0 : index
    %c0_10 = arith.constant 0 : index
    %10 = vector.load %arg5[%c0_9, %c0_10] : memref<1x128xf32, #tpu.memory_space<vmem>>, vector<1x128xf32>
    %11 = vector.broadcast %10 : vector<1x128xf32> to vector<8x128xf32>
    %12 = arith.addf %9, %11 : vector<8x128xf32>
    %cst_11 = arith.constant 0.000000e+00 : f32
    %13 = vector.broadcast %cst_11 : f32 to vector<8x128xf32>
    %14 = arith.maximumf %12, %13 : vector<8x128xf32>
    %c0_12 = arith.constant 0 : index
    %c0_13 = arith.constant 0 : index
    %15 = vector.load %arg6[%c0_12, %c0_13] : memref<128x4xf32, #tpu.memory_space<vmem>>, vector<128x4xf32>
    %cst_14 = arith.constant dense<0.000000e+00> : vector<8x4xf32>
    %16 = tpu.matmul %14, %15, %cst_14 {dimension_numbers = #tpu.dot_dimension_numbers<[1], [0], [0], [1], [0, 0, 1, 1], [], []>} : vector<8x128xf32>, vector<128x4xf32>, vector<8x4xf32> -> vector<8x4xf32>
    %c0_15 = arith.constant 0 : index
    %c0_16 = arith.constant 0 : index
    %17 = vector.load %arg7[%c0_15, %c0_16] : memref<1x4xf32, #tpu.memory_space<vmem>>, vector<1x4xf32>
    %18 = vector.broadcast %17 : vector<1x4xf32> to vector<8x4xf32>
    %19 = arith.addf %16, %18 : vector<8x4xf32>
    %c0_17 = arith.constant 0 : index
    %c0_18 = arith.constant 0 : index
    %20 = vector.load %arg8[%c0_17, %c0_18] : memref<8x4xf32, #tpu.memory_space<vmem>>, vector<8x4xf32>
    tpu.vector_store %arg8[%c0_17, %c0_18], %19 {strides = array<i32>} : memref<8x4xf32, #tpu.memory_space<vmem>>, vector<8x4xf32>,
    return
  }
  func.func @transform_0(%arg0: i32) -> (i32, i32) {
    %c0_i32 = arith.constant 0 : i32
    %c0_i32_0 = arith.constant 0 : i32
    return %arg0, %c0_i32 : i32, i32
  }
  func.func @transform_1(%arg0: i32) -> (i32, i32) {
    %c0_i32 = arith.constant 0 : i32
    %c0_i32_0 = arith.constant 0 : i32
    %c0_i32_1 = arith.constant 0 : i32
    return %c0_i32, %c0_i32_0 : i32, i32
  }
  func.func @transform_2(%arg0: i32) -> (i32, i32) {
    %c0_i32 = arith.constant 0 : i32
    %c0_i32_0 = arith.constant 0 : i32
    %c0_i32_1 = arith.constant 0 : i32
    return %c0_i32, %c0_i32_0 : i32, i32
  }
  func.func @transform_3(%arg0: i32) -> (i32, i32) {
    %c0_i32 = arith.constant 0 : i32
    %c0_i32_0 = arith.constant 0 : i32
    %c0_i32_1 = arith.constant 0 : i32
    return %c0_i32, %c0_i32_0 : i32, i32
  }
  func.func @transform_4(%arg0: i32) -> (i32, i32) {
    %c0_i32 = arith.constant 0 : i32
    %c0_i32_0 = arith.constant 0 : i32
    %c0_i32_1 = arith.constant 0 : i32
    return %c0_i32, %c0_i32_0 : i32, i32
  }
  func.func @transform_5(%arg0: i32) -> (i32, i32) {
    %c0_i32 = arith.constant 0 : i32
    %c0_i32_0 = arith.constant 0 : i32
    %c0_i32_1 = arith.constant 0 : i32
    return %c0_i32, %c0_i32_0 : i32, i32
  }
  func.func @transform_6(%arg0: i32) -> (i32, i32) {
    %c0_i32 = arith.constant 0 : i32
    %c0_i32_0 = arith.constant 0 : i32
    %c0_i32_1 = arith.constant 0 : i32
    return %c0_i32, %c0_i32_0 : i32, i32
  }
  func.func @transform_7(%arg0: i32) -> (i32, i32) {
    %c0_i32 = arith.constant 0 : i32
    %c0_i32_0 = arith.constant 0 : i32
    return %arg0, %c0_i32 : i32, i32
  }
}

</mosaic_0001>

<llo_original>
// kernel: tpu_custom_call.1
$region0: #{tpu_custom_call.1}
  #allocation0 [shape = 'u32[]', space=smem, size = 0x4, offset = 0x4, fixed_abs, tag = 'smem constant byte address 0x4 - core index']
  #allocation1 [shape = 'u32[144,128]{1,0:T(1,128)}', space=vmem, size = 0x12000, scoped, tag = 'internal scratch']
  %s0 = inlined_call_operand.vmem [shape: f32[8,8], index: 0, kind: input, shape index: {}]
  %s1 = inlined_call_operand.hbm [shape: f32[8,128], index: 1, kind: input, shape index: {}]
  %s2 = inlined_call_operand.vmem [shape: f32[1,128], index: 2, kind: input, shape index: {}]
  %s3 = inlined_call_operand.vmem [shape: f32[128,128], index: 3, kind: input, shape index: {}]
  %s4 = inlined_call_operand.vmem [shape: f32[1,128], index: 4, kind: input, shape index: {}]
  %s5 = inlined_call_operand.vmem [shape: f32[128,4], index: 5, kind: input, shape index: {}]
  %s6 = inlined_call_operand.vmem [shape: f32[1,4], index: 6, kind: input, shape index: {}]
  %s7 = inlined_call_operand.vmem [shape: f32[8,4], index: 7, kind: output, shape index: {}]
  %s8 = sld [smem:[#allocation0]]
  $region42: #{tpu_custom_call.1} parent=0
    _
  %s10 = ssub.s32 1, %s8
  %s11 = scalar_select 0, %s10, %s8
  $region1: #{tpu_custom_call.1} parent=0
    #allocation2 [shape = 'u8[4096]{0}', space=vmem, size = 0x1000, scoped, tag = 'input window, operand 1, single buffered']
    #allocation3 [shape = 's32[1]{0}', space=sflag, size = 0x4, scoped, tag = 'scoped memory for tpu_custom_call.1']
    %12 = vsyncpa [#allocation3], 0
    // Predicated region
    $region2: #{tpu_custom_call.1} parent=1 // pred_check
      _
    $region3: #{tpu_custom_call.1} parent=1 // pred_check_branch
      %14 = sbr.rel (0) target = $region5
    $region4: #{tpu_custom_call.1} parent=1 // pred_region
      _
    $region5: #{tpu_custom_call.1} parent=1 // pred_fallthru
      _
    // Predicated region
    $region6: #{tpu_custom_call.1} parent=1 // pred_check
      _
    $region7: #{tpu_custom_call.1} parent=1 // pred_check_branch
      %16 = sbr.rel (0) target = $region9
    $region8: #{tpu_custom_call.1} parent=1 // pred_region
      %s18 = ssub.s32 128, 128
      %19 = vsyncadd [#allocation3], %s18
      %s21 = sshll.u32 [#allocation2], 4
      %s22 = int_to_ptr.vmem [resolvable:$true] %s21
      %24 = dma.hbm_to_vmem [thread:$0]  %s1, 128, %s22, [#allocation3]
    $region9: #{tpu_custom_call.1} parent=1 // pred_fallthru
      _
    // Predicated region
    $region10: #{tpu_custom_call.1} parent=1 // pred_check
      _
    $region11: #{tpu_custom_call.1} parent=1 // pred_check_branch
      %26 = sbr.rel (0) target = $region13
    $region12: #{tpu_custom_call.1} parent=1 // pred_region
      _
    $region13: #{tpu_custom_call.1} parent=1 // pred_fallthru
      _
    // Predicated region
    $region14: #{tpu_custom_call.1} parent=1 // pred_check
      _
    $region15: #{tpu_custom_call.1} parent=1 // pred_check_branch
      %28 = sbr.rel (0) target = $region17
    $region16: #{tpu_custom_call.1} parent=1 // pred_region
      _
    $region17: #{tpu_custom_call.1} parent=1 // pred_fallthru
      _
    // Predicated region
    $region18: #{tpu_custom_call.1} parent=1 // pred_check
      _
    $region19: #{tpu_custom_call.1} parent=1 // pred_check_branch
      %30 = sbr.rel (0) target = $region21
    $region20: #{tpu_custom_call.1} parent=1 // pred_region
      _
    $region21: #{tpu_custom_call.1} parent=1 // pred_fallthru
      _
    // Predicated region
    $region22: #{tpu_custom_call.1} parent=1 // pred_check
      _
    $region23: #{tpu_custom_call.1} parent=1 // pred_check_branch
      %32 = sbr.rel (0) target = $region25
    $region24: #{tpu_custom_call.1} parent=1 // pred_region
      _
    $region25: #{tpu_custom_call.1} parent=1 // pred_fallthru
      _
    // Predicated region
    $region26: #{tpu_custom_call.1} parent=1 // pred_check
      _
    $region27: #{tpu_custom_call.1} parent=1 // pred_check_branch
      %34 = sbr.rel (0) target = $region29
    $region28: #{tpu_custom_call.1} parent=1 // pred_region
      _
    $region29: #{tpu_custom_call.1} parent=1 // pred_fallthru
      _
    // Predicated region
    $region30: #{tpu_custom_call.1} parent=1 // pred_check
      _
    $region31: #{tpu_custom_call.1} parent=1 // pred_check_branch
      %36 = sbr.rel (0) target = $region33
    $region32: #{tpu_custom_call.1} parent=1 // pred_region
      %37 = dma.done [#allocation3], 128
    $region33: #{tpu_custom_call.1} parent=1 // pred_fallthru
      _
    %v38 = vld [vmem:[%s0] sm:$0xff]
    %v39 = vld [vmem:[#allocation2] sm:$0xff]
    %v40 = vld [vmem:[%s2] sm:$0x1]
    %v42 = vlaneseq
    %v43 = vshrl.u32 %v42, 7
    %v44 = vsub.s32 0, %v43
    %v45 = vrot.slane %v40, %v44
    %vm47 = vcmask 64512
    %v49 = vsel %vm47, %v38, 0
    %51 = vmatprep.subr.mxu0 0.0
    %52 = vmatpush1.msra.mxu0 %v39
    %53 = vmatprep.subr.mxu0 0.0
    %54 = vmatpush1.msra.mxu0 0.0
    %55 = vmatprep.subr.mxu0 0.0
    %56 = vmatpush1.msra.mxu0 0.0
    %57 = vmatprep.subr.mxu0 0.0
    %58 = vmatpush1.msra.mxu0 0.0
    %59 = vmatprep.subr.mxu0 0.0
    %60 = vmatpush1.msra.mxu0 0.0
    %61 = vmatprep.subr.mxu0 0.0
    %62 = vmatpush1.msra.mxu0 0.0
    %63 = vmatprep.subr.mxu0 0.0
    %64 = vmatpush1.msra.mxu0 0.0
    %65 = vmatprep.subr.mxu0 0.0
    %66 = vmatpush1.msra.mxu0 0.0
    %67 = vmatprep.subr.mxu0 0.0
    %68 = vmatpush1.msra.mxu0 0.0
    %69 = vmatprep.subr.mxu0 0.0
    %70 = vmatpush1.msra.mxu0 0.0
    %71 = vmatprep.subr.mxu0 0.0
    %72 = vmatpush1.msra.mxu0 0.0
    %73 = vmatprep.subr.mxu0 0.0
    %74 = vmatpush1.msra.mxu0 0.0
    %75 = vmatprep.subr.mxu0 0.0
    %76 = vmatpush1.msra.mxu0 0.0
    %77 = vmatprep.subr.mxu0 0.0
    %78 = vmatpush1.msra.mxu0 0.0
    %79 = vmatprep.subr.mxu0 0.0
    %80 = vmatpush1.msra.mxu0 0.0
    %81 = vmatprep.subr.mxu0 0.0
    %82 = vmatpush1.msra.mxu0 0.0
    %83 = vmatprep.subr.mxu0 0.0
    %84 = vmatpush1.msra.mxu0 0.0
    %85 = vmatprep.subr.mxu0 0.0
    %86 = vmatpush1.msra.mxu0 0.0
    %87 = vmatprep.subr.mxu0 0.0
    %88 = vmatpush1.msra.mxu0 0.0
    %89 = vmatprep.subr.mxu0 0.0
    %90 = vmatpush1.msra.mxu0 0.0
    %91 = vmatprep.subr.mxu0 0.0
    %92 = vmatpush1.msra.mxu0 0.0
    %93 = vmatprep.subr.mxu0 0.0
    %94 = vmatpush1.msra.mxu0 0.0
    %95 = vmatprep.subr.mxu0 0.0
    %96 = vmatpush1.msra.mxu0 0.0
    %97 = vmatprep.subr.mxu0 0.0
    %98 = vmatpush1.msra.mxu0 0.0
    %99 = vmatprep.subr.mxu0 0.0
    %100 = vmatpush1.msra.mxu0 0.0
    %101 = vmatprep.subr.mxu0 0.0
    %102 = vmatpush1.msra.mxu0 0.0
    %103 = vmatprep.subr.mxu0 0.0
    %104 = vmatpush1.msra.mxu0 0.0
    %105 = vmatprep.subr.mxu0 0.0
    %106 = vmatpush1.msra.mxu0 0.0
    %107 = vmatprep.subr.mxu0 0.0
    %108 = vmatpush1.msra.mxu0 0.0
    %109 = vmatprep.subr.mxu0 0.0
    %110 = vmatpush1.msra.mxu0 0.0
    %111 = vmatprep.subr.mxu0 0.0
    %112 = vmatpush1.msra.mxu0 0.0
    %113 = vmatprep.subr.mxu0 0.0
    %114 = vmatpush1.msra.mxu0 0.0
    %115 = vmatprep.mubr.f32.mxu0 0.0
    %116 = vmatmul.mubr.f32.gmra.mrb[0].mxu0 %v49
    %v117 = vpop.f32.mrb[0].mxu0
    %v118 = vadd.f32 %v45, %v117
    %v119 = vpop.f32.mrb[0].mxu0
    %120 = vdwg.mxu0
    %v121 = vmax.f32 %v118, 0.0
    %v122 = vld [vmem:[%s3] sm:$0xff]
    %v123 = vld [vmem:[%s3 + $0x8] sm:$0xff]
    %v124 = vld [vmem:[%s3 + $0x10] sm:$0xff]
    %v125 = vld [vmem:[%s3 + $0x18] sm:$0xff]
    %v126 = vld [vmem:[%s3 + $0x20] sm:$0xff]
    %v127 = vld [vmem:[%s3 + $0x28] sm:$0xff]
    %v128 = vld [vmem:[%s3 + $0x30] sm:$0xff]
    %v129 = vld [vmem:[%s3 + $0x38] sm:$0xff]
    %v130 = vld [vmem:[%s3 + $0x40] sm:$0xff]
    %v131 = vld [vmem:[%s3 + $0x48] sm:$0xff]
    %v132 = vld [vmem:[%s3 + $0x50] sm:$0xff]
    %v133 = vld [vmem:[%s3 + $0x58] sm:$0xff]
    %v134 = vld [vmem:[%s3 + $0x60] sm:$0xff]
    %v135 = vld [vmem:[%s3 + $0x68] sm:$0xff]
    %v136 = vld [vmem:[%s3 + $0x70] sm:$0xff]
    %v137 = vld [vmem:[%s3 + $0x78] sm:$0xff]
    %v138 = vld [vmem:[%s4] sm:$0x1]
    %v140 = vlaneseq
    %v141 = vshrl.u32 %v140, 7
    %v142 = vsub.s32 0, %v141
    %v143 = vrot.slane %v138, %v142
    %145 = vmatprep.subr.mxu0 0.0
    %146 = vmatpush1.msra.mxu0 %v122
    %147 = vmatprep.subr.mxu0 0.0
    %148 = vmatpush1.msra.mxu0 %v123
    %149 = vmatprep.subr.mxu0 0.0
    %150 = vmatpush1.msra.mxu0 %v124
    %151 = vmatprep.subr.mxu0 0.0
    %152 = vmatpush1.msra.mxu0 %v125
    %153 = vmatprep.subr.mxu0 0.0
    %154 = vmatpush1.msra.mxu0 %v126
    %155 = vmatprep.subr.mxu0 0.0
    %156 = vmatpush1.msra.mxu0 %v127
    %157 = vmatprep.subr.mxu0 0.0
    %158 = vmatpush1.msra.mxu0 %v128
    %159 = vmatprep.subr.mxu0 0.0
    %160 = vmatpush1.msra.mxu0 %v129
    %161 = vmatprep.subr.mxu0 0.0
    %162 = vmatpush1.msra.mxu0 %v130
    %163 = vmatprep.subr.mxu0 0.0
    %164 = vmatpush1.msra.mxu0 %v131
    %165 = vmatprep.subr.mxu0 0.0
    %166 = vmatpush1.msra.mxu0 %v132
    %167 = vmatprep.subr.mxu0 0.0
    %168 = vmatpush1.msra.mxu0 %v133
    %169 = vmatprep.subr.mxu0 0.0
    %170 = vmatpush1.msra.mxu0 %v134
    %171 = vmatprep.subr.mxu0 0.0
    %172 = vmatpush1.msra.mxu0 %v135
    %173 = vmatprep.subr.mxu0 0.0
    %174 = vmatpush1.msra.mxu0 %v136
    %175 = vmatprep.subr.mxu0 0.0
    %176 = vmatpush1.msra.mxu0 %v137
    %177 = vmatprep.subr.mxu0 0.0
    %178 = vmatpush1.msra.mxu0 0.0
    %179 = vmatprep.subr.mxu0 0.0
    %180 = vmatpush1.msra.mxu0 0.0
    %181 = vmatprep.subr.mxu0 0.0
    %182 = vmatpush1.msra.mxu0 0.0
    %183 = vmatprep.subr.mxu0 0.0
    %184 = vmatpush1.msra.mxu0 0.0
    %185 = vmatprep.subr.mxu0 0.0
    %186 = vmatpush1.msra.mxu0 0.0
    %187 = vmatprep.subr.mxu0 0.0
    %188 = vmatpush1.msra.mxu0 0.0
    %189 = vmatprep.subr.mxu0 0.0
    %190 = vmatpush1.msra.mxu0 0.0
    %191 = vmatprep.subr.mxu0 0.0
    %192 = vmatpush1.msra.mxu0 0.0
    %193 = vmatprep.subr.mxu0 0.0
    %194 = vmatpush1.msra.mxu0 0.0
    %195 = vmatprep.subr.mxu0 0.0
    %196 = vmatpush1.msra.mxu0 0.0
    %197 = vmatprep.subr.mxu0 0.0
    %198 = vmatpush1.msra.mxu0 0.0
    %199 = vmatprep.subr.mxu0 0.0
    %200 = vmatpush1.msra.mxu0 0.0
    %201 = vmatprep.subr.mxu0 0.0
    %202 = vmatpush1.msra.mxu0 0.0
    %203 = vmatprep.subr.mxu0 0.0
    %204 = vmatpush1.msra.mxu0 0.0
    %205 = vmatprep.subr.mxu0 0.0
    %206 = vmatpush1.msra.mxu0 0.0
    %207 = vmatprep.subr.mxu0 0.0
    %208 = vmatpush1.msra.mxu0 0.0
    %209 = vmatprep.mubr.f32.mxu0 0.0
    %210 = vmatmul.mubr.f32.gmra.mrb[0].mxu0 %v121
    %v211 = vpop.f32.mrb[0].mxu0
    %v212 = vadd.f32 %v143, %v211
    %v213 = vpop.f32.mrb[0].mxu0
    %214 = vdwg.mxu0
    %v215 = vmax.f32 %v212, 0.0
    %v216 = vld [vmem:[%s5] sm:$0xff]
    %v217 = vld [vmem:[%s5 + $0x8] sm:$0xff]
    %v218 = vld [vmem:[%s5 + $0x10] sm:$0xff]
    %v219 = vld [vmem:[%s5 + $0x18] sm:$0xff]
    %v220 = vld [vmem:[%s5 + $0x20] sm:$0xff]
    %v221 = vld [vmem:[%s5 + $0x28] sm:$0xff]
    %v222 = vld [vmem:[%s5 + $0x30] sm:$0xff]
    %v223 = vld [vmem:[%s5 + $0x38] sm:$0xff]
    %v224 = vld [vmem:[%s5 + $0x40] sm:$0xff]
    %v225 = vld [vmem:[%s5 + $0x48] sm:$0xff]
    %v226 = vld [vmem:[%s5 + $0x50] sm:$0xff]
    %v227 = vld [vmem:[%s5 + $0x58] sm:$0xff]
    %v228 = vld [vmem:[%s5 + $0x60] sm:$0xff]
    %v229 = vld [vmem:[%s5 + $0x68] sm:$0xff]
    %v230 = vld [vmem:[%s5 + $0x70] sm:$0xff]
    %v231 = vld [vmem:[%s5 + $0x78] sm:$0xff]
    %v232 = vld [vmem:[%s6] sm:$0x1]
    %v234 = vlaneseq
    %v235 = vshrl.u32 %v234, 7
    %v236 = vsub.s32 0, %v235
    %v237 = vrot.slane %v232, %v236
    %239 = vmatprep.subr.mxu0 0.0
    %240 = vmatpush1.msra.mxu0 %v216
    %241 = vmatprep.subr.mxu0 0.0
    %242 = vmatpush1.msra.mxu0 %v217
    %243 = vmatprep.subr.mxu0 0.0
    %244 = vmatpush1.msra.mxu0 %v218
    %245 = vmatprep.subr.mxu0 0.0
    %246 = vmatpush1.msra.mxu0 %v219
    %247 = vmatprep.subr.mxu0 0.0
    %248 = vmatpush1.msra.mxu0 %v220
    %249 = vmatprep.subr.mxu0 0.0
    %250 = vmatpush1.msra.mxu0 %v221
    %251 = vmatprep.subr.mxu0 0.0
    %252 = vmatpush1.msra.mxu0 %v222
    %253 = vmatprep.subr.mxu0 0.0
    %254 = vmatpush1.msra.mxu0 %v223
    %255 = vmatprep.subr.mxu0 0.0
    %256 = vmatpush1.msra.mxu0 %v224
    %257 = vmatprep.subr.mxu0 0.0
    %258 = vmatpush1.msra.mxu0 %v225
    %259 = vmatprep.subr.mxu0 0.0
    %260 = vmatpush1.msra.mxu0 %v226
    %261 = vmatprep.subr.mxu0 0.0
    %262 = vmatpush1.msra.mxu0 %v227
    %263 = vmatprep.subr.mxu0 0.0
    %264 = vmatpush1.msra.mxu0 %v228
    %265 = vmatprep.subr.mxu0 0.0
    %266 = vmatpush1.msra.mxu0 %v229
    %267 = vmatprep.subr.mxu0 0.0
    %268 = vmatpush1.msra.mxu0 %v230
    %269 = vmatprep.subr.mxu0 0.0
    %270 = vmatpush1.msra.mxu0 %v231
    %271 = vmatprep.subr.mxu0 0.0
    %272 = vmatpush1.msra.mxu0 0.0
    %273 = vmatprep.subr.mxu0 0.0
    %274 = vmatpush1.msra.mxu0 0.0
    %275 = vmatprep.subr.mxu0 0.0
    %276 = vmatpush1.msra.mxu0 0.0
    %277 = vmatprep.subr.mxu0 0.0
    %278 = vmatpush1.msra.mxu0 0.0
    %279 = vmatprep.subr.mxu0 0.0
    %280 = vmatpush1.msra.mxu0 0.0
    %281 = vmatprep.subr.mxu0 0.0
    %282 = vmatpush1.msra.mxu0 0.0
    %283 = vmatprep.subr.mxu0 0.0
    %284 = vmatpush1.msra.mxu0 0.0
    %285 = vmatprep.subr.mxu0 0.0
    %286 = vmatpush1.msra.mxu0 0.0
    %287 = vmatprep.subr.mxu0 0.0
    %288 = vmatpush1.msra.mxu0 0.0
    %289 = vmatprep.subr.mxu0 0.0
    %290 = vmatpush1.msra.mxu0 0.0
    %291 = vmatprep.subr.mxu0 0.0
    %292 = vmatpush1.msra.mxu0 0.0
    %293 = vmatprep.subr.mxu0 0.0
    %294 = vmatpush1.msra.mxu0 0.0
    %295 = vmatprep.subr.mxu0 0.0
    %296 = vmatpush1.msra.mxu0 0.0
    %297 = vmatprep.subr.mxu0 0.0
    %298 = vmatpush1.msra.mxu0 0.0
    %299 = vmatprep.subr.mxu0 0.0
    %300 = vmatpush1.msra.mxu0 0.0
    %301 = vmatprep.subr.mxu0 0.0
    %302 = vmatpush1.msra.mxu0 0.0
    %303 = vmatprep.mubr.f32.mxu0 0.0
    %304 = vmatmul.mubr.f32.gmra.mrb[0].mxu0 %v215
    %v305 = vpop.f32.mrb[0].mxu0
    %v306 = vadd.f32 %v237, %v305
    %v307 = vpop.f32.mrb[0].mxu0
    %308 = vdwg.mxu0
    %vm309 = vcmask 31744
    %310 = vst.msk [vmem:[%s7] sm:$0xff] %vm309, %v306
    // Predicated region
    $region34: #{tpu_custom_call.1} parent=1 // pred_check
      _
    $region35: #{tpu_custom_call.1} parent=1 // pred_check_branch
      %312 = sbr.rel (0) target = $region37
    $region36: #{tpu_custom_call.1} parent=1 // pred_region
      _
    $region37: #{tpu_custom_call.1} parent=1 // pred_fallthru
      _
    // Predicated region
    $region38: #{tpu_custom_call.1} parent=1 // pred_check
      _
    $region39: #{tpu_custom_call.1} parent=1 // pred_check_branch
      %314 = sbr.rel (0) target = $region41
    $region40: #{tpu_custom_call.1} parent=1 // pred_region
      _
    $region41: #{tpu_custom_call.1} parent=1 // pred_fallthru
      _
    %315 = vsyncpa [#allocation3], 1

</llo_original>
